<compile_context>
chip_gen: v6e
topology: v6e:2x2x1
jax: 0.10.0
libtpu: 0.0.40
codegen_flags: <defaults>
</compile_context>

<pallas_src>
import functools

import jax
import jax.numpy as jnp
from jax.experimental import pallas as pl
from jax.experimental.pallas import tpu as pltpu


def _round_up(x, m):
    return ((x + m - 1) // m) * m


# Per-grid-step VMEM working-set budget (<= ~24 MiB keeps v7x's 64 MiB VMEM
# comfortable); the explicit scoped-VMEM limit covers v5e's 16 MiB default.
_VMEM_TILE_BUDGET = 24 * 1024 * 1024
_VMEM_LIMIT_BYTES = 32 * 1024 * 1024


def _nfwfm_kernel(x_ref, m_ref, o_ref, *, num_fields, embed_dim, mxu_dtype):
    # x_ref: (tb, F*E) lane-dense batch slab (input dtype)
    # m_ref: (F*E, F*E) kron(W^T, I_E), resident across the grid (mxu_dtype)
    # o_ref: (tb, E)   output slab
    x = x_ref[...]
    # Field contraction y[b, i*E+e] = sum_j W[i, j] * x[b, j*E+e]:
    # one MXU matmul of the slab against the resident kron matrix, f32 acc.
    y = jnp.dot(x.astype(mxu_dtype), m_ref[...],
                preferred_element_type=jnp.float32)
    # Fused epilogue (VPU, f32): out[b, e] = sum_i x[b, i, e] * y[b, i, e].
    # No (tb, F*E) f32 temporaries are materialized.
    e = embed_dim
    acc = x[:, :e].astype(jnp.float32) * y[:, :e]
    for i in range(1, num_fields):
        lo = i * e
        acc = acc + x[:, lo:lo + e].astype(jnp.float32) * y[:, lo:lo + e]
    o_ref[...] = acc.astype(o_ref.dtype)


def _batch_tile(batch, fe, e, in_bytes, mxu_bytes, block_batch):
    # Per-row VMEM bytes: double-buffered input/output slabs + in-kernel
    # f32 temporaries (MXU result y, acc) + the MXU cast of the slab.
    per_row = (2 * fe * in_bytes + 2 * e * in_bytes
               + fe * 4 + fe * mxu_bytes + e * 4)
    m_bytes = 2 * fe * fe * mxu_bytes          # resident kron matrix (2 bufs)
    cap = max(16, (_VMEM_TILE_BUDGET - m_bytes) // per_row)
    # Keep roughly >= 8 grid blocks when the batch allows it (feeds both v7x
    # TensorCores) and round to a multiple of 16 (full bf16 sublane packing).
    tb = min(int(block_batch), cap, _round_up(pl.cdiv(batch, 8), 16))
    return max(16, (tb // 16) * 16)


def nfwfm_forward(inputs, weight, *, block_batch=4096, mxu_dtype=jnp.bfloat16):
    """inputs: (B, F, E); weight: (1, F, F) or (F, F); returns (B, E).

    The elementwise/accumulation path follows inputs.dtype; the MXU field
    contraction runs in `mxu_dtype` (bf16 by default; pass jnp.float32 for an
    exact f32 quadratic form).  Accumulation is always float32.
    """
    B, F, E = inputs.shape
    FE = F * E
    dtype = inputs.dtype

    # Field-pair weights folded with the embedding identity so the whole field
    # contraction is one lane-dense MXU matmul:
    #   M[j*E+e', i*E+e] = W[i, j] * (e' == e)  ==  kron(W^T, I_E)
    w2 = weight.reshape(F, F).astype(jnp.float32)
    m1 = jnp.kron(w2.T, jnp.eye(E, dtype=jnp.float32)).astype(mxu_dtype)

    # Free (metadata-only) reshape: (B, F, E) -> (B, F*E), contiguous & lane-dense.
    x2 = inputs.reshape(B, FE)

    tb = _batch_tile(B, FE, E, jnp.dtype(dtype).itemsize,
                     jnp.dtype(mxu_dtype).itemsize, block_batch)
    # Ragged tail (B % tb != 0) is handled by Pallas masked boundary stores;
    # no wrapper-side padding or trailing slice.
    grid = (pl.cdiv(B, tb),)

    kernel = functools.partial(_nfwfm_kernel, num_fields=F, embed_dim=E,
                               mxu_dtype=mxu_dtype)
    return pl.pallas_call(
        kernel,
        out_shape=jax.ShapeDtypeStruct((B, E), dtype),
        grid_spec=pltpu.PrefetchScalarGridSpec(
            num_scalar_prefetch=0,
            grid=grid,
            in_specs=[
                # Batch slab (double-buffered).  If profiling shows exposed
                # input DMA, add pipeline_mode=pl.Buffered(3) here.
                pl.BlockSpec((tb, FE), lambda b: (b, 0)),
                # Constant index_map -> kron(W^T, I_E) is fetched once and
                # stays resident in VMEM for the whole grid (no per-step DMA).
                pl.BlockSpec((FE, FE), lambda b: (0, 0)),
            ],
            out_specs=pl.BlockSpec((tb, E), lambda b: (b, 0)),
        ),
        compiler_params=pltpu.CompilerParams(
            # Batch blocks are embarrassingly parallel -> megacore sharding.
            dimension_semantics=("parallel",),
            vmem_limit_bytes=_VMEM_LIMIT_BYTES,
        ),
    )(x2, m1)


def nfwfm_reference(inputs, weight):
    # Pure-broadcast transcription of the PyTorch forward (f32, no matmuls).
    x = inputs.astype(jnp.float32)
    f = weight.shape[-1]
    w = weight.reshape(f, f).astype(jnp.float32)
    inter = x[:, :, None, :] * x[:, None, :, :]                 # (B, F, F, E)
    return jnp.sum(inter * w[None, :, :, None], axis=(1, 2))    # (B, E)


if __name__ == "__main__":
    key = jax.random.PRNGKey(0)
    k_x, k_w = jax.random.split(key)

    batch, num_fields, embed_dim = 2, 8, 32
    inputs = jax.random.normal(k_x, (batch, num_fields, embed_dim), dtype=jnp.float32)
    weight = jax.random.normal(k_w, (1, num_fields, num_fields), dtype=jnp.float32)
    ref = nfwfm_reference(inputs, weight)

    # 1) Exact f32 MXU path, tiny batch (B=2 < tile=16 -> masked ragged block).
    out = jax.block_until_ready(nfwfm_forward(inputs, weight, mxu_dtype=jnp.float32))
    assert out.shape == (batch, embed_dim), out.shape
    assert jnp.allclose(out, ref, atol=1e-3, rtol=1e-3), "f32 mismatch vs reference"
    assert bool(jnp.all(jnp.isfinite(out))), "non-finite values in f32 output"

    # 2) Ragged multi-block grid (B % tb != 0, no wrapper-side padding).
    x_big = jax.random.normal(jax.random.fold_in(k_x, 1),
                              (300, num_fields, embed_dim), dtype=jnp.float32)
    out_big = jax.block_until_ready(
        nfwfm_forward(x_big, weight, block_batch=128, mxu_dtype=jnp.float32))
    ref_big = nfwfm_reference(x_big, weight)
    assert out_big.shape == (300, embed_dim), out_big.shape
    assert jnp.allclose(out_big, ref_big, atol=1e-3, rtol=1e-3), "tiled f32 mismatch"
    assert bool(jnp.all(jnp.isfinite(out_big))), "garbage tail leaked into valid rows"

    # 3) Default fast path: f32 activations, bf16 MXU operands, f32 accumulation.
    out_mx = jax.block_until_ready(nfwfm_forward(inputs, weight))
    assert jnp.allclose(out_mx, ref, atol=1e-1, rtol=5e-2), "bf16-MXU mismatch"

    # 4) bf16 activation path (recommended production dtype).
    out_bf = jax.block_until_ready(
        nfwfm_forward(inputs.astype(jnp.bfloat16), weight.astype(jnp.bfloat16)))
    ref_bf = nfwfm_reference(inputs.astype(jnp.bfloat16), weight.astype(jnp.bfloat16))
    assert jnp.allclose(out_bf.astype(jnp.float32), ref_bf, atol=5e-2, rtol=5e-2), \
        "bf16 mismatch vs f32 reference"

    print("KERNEL_OK")
</pallas_src>

<mosaic_0001>
module attributes {stable_mosaic.version = 11 : i64} {
  func.func @_nfwfm_kernel(%arg0: i32, %arg1: memref<16x256xf32, #tpu.memory_space<vmem>>, %arg2: memref<256x256xf32, #tpu.memory_space<vmem>>, %arg3: memref<16x32xf32, #tpu.memory_space<vmem>>) attributes {dimension_semantics = [#tpu.dimension_semantics<parallel>], iteration_bounds = array<i64: 1>, scalar_prefetch = 0 : i64, scratch_operands = 0 : i64, tpu.core_type = #tpu.core_type<tc>, window_params = [{transform_indices = @transform_0, window_bounds = array<i64: 16, 256>}, {pipeline_mode = #tpu.pipeline_mode<synchronous>, transform_indices = @transform_1, window_bounds = array<i64: 256, 256>}, {transform_indices = @transform_2, window_bounds = array<i64: 16, 32>}]} {
    %c0 = arith.constant 0 : index
    %c0_0 = arith.constant 0 : index
    %0 = vector.load %arg1[%c0, %c0_0] : memref<16x256xf32, #tpu.memory_space<vmem>>, vector<16x256xf32>
    %c0_1 = arith.constant 0 : index
    %c0_2 = arith.constant 0 : index
    %1 = vector.load %arg2[%c0_1, %c0_2] : memref<256x256xf32, #tpu.memory_space<vmem>>, vector<256x256xf32>
    %cst = arith.constant dense<0.000000e+00> : vector<16x256xf32>
    %2 = tpu.matmul %0, %1, %cst {dimension_numbers = #tpu.dot_dimension_numbers<[1], [0], [0], [1], [0, 0, 1, 1], [], []>} : vector<16x256xf32>, vector<256x256xf32>, vector<16x256xf32> -> vector<16x256xf32>
    %3 = vector.extract_strided_slice %0 {offsets = [0, 0], sizes = [16, 32], strides = [1, 1]} : vector<16x256xf32> to vector<16x32xf32>
    %4 = vector.extract_strided_slice %2 {offsets = [0, 0], sizes = [16, 32], strides = [1, 1]} : vector<16x256xf32> to vector<16x32xf32>
    %5 = arith.mulf %3, %4 : vector<16x32xf32>
    %6 = vector.extract_strided_slice %0 {offsets = [0, 32], sizes = [16, 32], strides = [1, 1]} : vector<16x256xf32> to vector<16x32xf32>
    %7 = vector.extract_strided_slice %2 {offsets = [0, 32], sizes = [16, 32], strides = [1, 1]} : vector<16x256xf32> to vector<16x32xf32>
    %8 = arith.mulf %6, %7 : vector<16x32xf32>
    %9 = arith.addf %5, %8 : vector<16x32xf32>
    %10 = vector.extract_strided_slice %0 {offsets = [0, 64], sizes = [16, 32], strides = [1, 1]} : vector<16x256xf32> to vector<16x32xf32>
    %11 = vector.extract_strided_slice %2 {offsets = [0, 64], sizes = [16, 32], strides = [1, 1]} : vector<16x256xf32> to vector<16x32xf32>
    %12 = arith.mulf %10, %11 : vector<16x32xf32>
    %13 = arith.addf %9, %12 : vector<16x32xf32>
    %14 = vector.extract_strided_slice %0 {offsets = [0, 96], sizes = [16, 32], strides = [1, 1]} : vector<16x256xf32> to vector<16x32xf32>
    %15 = vector.extract_strided_slice %2 {offsets = [0, 96], sizes = [16, 32], strides = [1, 1]} : vector<16x256xf32> to vector<16x32xf32>
    %16 = arith.mulf %14, %15 : vector<16x32xf32>
    %17 = arith.addf %13, %16 : vector<16x32xf32>
    %18 = vector.extract_strided_slice %0 {offsets = [0, 128], sizes = [16, 32], strides = [1, 1]} : vector<16x256xf32> to vector<16x32xf32>
    %19 = vector.extract_strided_slice %2 {offsets = [0, 128], sizes = [16, 32], strides = [1, 1]} : vector<16x256xf32> to vector<16x32xf32>
    %20 = arith.mulf %18, %19 : vector<16x32xf32>
    %21 = arith.addf %17, %20 : vector<16x32xf32>
    %22 = vector.extract_strided_slice %0 {offsets = [0, 160], sizes = [16, 32], strides = [1, 1]} : vector<16x256xf32> to vector<16x32xf32>
    %23 = vector.extract_strided_slice %2 {offsets = [0, 160], sizes = [16, 32], strides = [1, 1]} : vector<16x256xf32> to vector<16x32xf32>
    %24 = arith.mulf %22, %23 : vector<16x32xf32>
    %25 = arith.addf %21, %24 : vector<16x32xf32>
    %26 = vector.extract_strided_slice %0 {offsets = [0, 192], sizes = [16, 32], strides = [1, 1]} : vector<16x256xf32> to vector<16x32xf32>
    %27 = vector.extract_strided_slice %2 {offsets = [0, 192], sizes = [16, 32], strides = [1, 1]} : vector<16x256xf32> to vector<16x32xf32>
    %28 = arith.mulf %26, %27 : vector<16x32xf32>
    %29 = arith.addf %25, %28 : vector<16x32xf32>
    %30 = vector.extract_strided_slice %0 {offsets = [0, 224], sizes = [16, 32], strides = [1, 1]} : vector<16x256xf32> to vector<16x32xf32>
    %31 = vector.extract_strided_slice %2 {offsets = [0, 224], sizes = [16, 32], strides = [1, 1]} : vector<16x256xf32> to vector<16x32xf32>
    %32 = arith.mulf %30, %31 : vector<16x32xf32>
    %33 = arith.addf %29, %32 : vector<16x32xf32>
    %c0_3 = arith.constant 0 : index
    %c0_4 = arith.constant 0 : index
    %34 = vector.load %arg3[%c0_3, %c0_4] : memref<16x32xf32, #tpu.memory_space<vmem>>, vector<16x32xf32>
    tpu.vector_store %arg3[%c0_3, %c0_4], %33 {strides = array<i32>} : memref<16x32xf32, #tpu.memory_space<vmem>>, vector<16x32xf32>,
    return
  }
  func.func @transform_0(%arg0: i32) -> (i32, i32) {
    %c0_i32 = arith.constant 0 : i32
    %c0_i32_0 = arith.constant 0 : i32
    return %arg0, %c0_i32 : i32, i32
  }
  func.func @transform_1(%arg0: i32) -> (i32, i32) {
    %c0_i32 = arith.constant 0 : i32
    %c0_i32_0 = arith.constant 0 : i32
    %c0_i32_1 = arith.constant 0 : i32
    return %c0_i32, %c0_i32_0 : i32, i32
  }
  func.func @transform_2(%arg0: i32) -> (i32, i32) {
    %c0_i32 = arith.constant 0 : i32
    %c0_i32_0 = arith.constant 0 : i32
    return %arg0, %c0_i32 : i32, i32
  }
}

</mosaic_0001>

<llo_original>
// kernel: tpu_custom_call.1
$region0: #{tpu_custom_call.1}
  #allocation0 [shape = 'u32[]', space=smem, size = 0x4, offset = 0x4, fixed_abs, tag = 'smem constant byte address 0x4 - core index']
  #allocation1 [shape = 'u32[144,128]{1,0:T(1,128)}', space=vmem, size = 0x12000, scoped, tag = 'internal scratch']
  %s0 = inlined_call_operand.hbm [shape: f32[2,256], index: 0, kind: input, shape index: {}]
  %s1 = inlined_call_operand.hbm [shape: f32[256,256], index: 1, kind: input, shape index: {}]
  %s2 = inlined_call_operand.hbm [shape: f32[2,32], index: 2, kind: output, shape index: {}]
  %s3 = sld [smem:[#allocation0]]
  $region26: #{tpu_custom_call.1} parent=0
    _
  %s5 = ssub.s32 1, %s3
  %s6 = scalar_select 0, %s5, %s3
  $region1: #{tpu_custom_call.1} parent=0
    #allocation2 [shape = 'u8[16384]{0}', space=vmem, size = 0x4000, scoped, tag = 'input window, operand 0, single buffered']
    #allocation3 [shape = 's32[1]{0}', space=sflag, size = 0x4, scoped, tag = 'scoped memory for tpu_custom_call.1']
    #allocation4 [shape = 's32[1]{0}', space=sflag, size = 0x4, scoped, tag = 'scoped memory for tpu_custom_call.1']
    #allocation5 [shape = 'u8[262144]{0}', space=vmem, size = 0x40000, scoped, tag = 'input window, operand 1, single buffered']
    #allocation6 [shape = 's32[1]{0}', space=sflag, size = 0x4, scoped, tag = 'scoped memory for tpu_custom_call.1']
    #allocation7 [shape = 'u8[8192]{0}', space=vmem, size = 0x2000, scoped, tag = 'output window, operand 0, single buffered']
    %7 = vsyncpa [#allocation3], 0
    %8 = vsyncpa [#allocation6], 0
    %9 = vsyncpa [#allocation4], 0
    // Predicated region
    $region2: #{tpu_custom_call.1} parent=1 // pred_check
      _
    $region3: #{tpu_custom_call.1} parent=1 // pred_check_branch
      %11 = sbr.rel (0) target = $region5
    $region4: #{tpu_custom_call.1} parent=1 // pred_region
      %s13 = ssub.s32 512, 64
      %14 = vsyncadd [#allocation3], %s13
      %s15 = sshll.u32 [#allocation2], 4
      %s16 = int_to_ptr.vmem [resolvable:$true] %s15
      %21 = dma.hbm_to_vmem [thread:$0]  %s0, 64, %s16, [#allocation3], 64, 64, 4
    $region5: #{tpu_custom_call.1} parent=1 // pred_fallthru
      _
    // Predicated region
    $region6: #{tpu_custom_call.1} parent=1 // pred_check
      _
    $region7: #{tpu_custom_call.1} parent=1 // pred_check_branch
      %23 = sbr.rel (0) target = $region9
    $region8: #{tpu_custom_call.1} parent=1 // pred_region
      %s25 = ssub.s32 8192, 8192
      %26 = vsyncadd [#allocation6], %s25
      %s27 = sshll.u32 [#allocation5], 4
      %s28 = int_to_ptr.vmem [resolvable:$true] %s27
      %33 = dma.hbm_to_vmem [thread:$0]  %s1, 8192, %s28, [#allocation6], 256, 256, 16
    $region9: #{tpu_custom_call.1} parent=1 // pred_fallthru
      _
    // Predicated region
    $region10: #{tpu_custom_call.1} parent=1 // pred_check
      _
    $region11: #{tpu_custom_call.1} parent=1 // pred_check_branch
      %35 = sbr.rel (0) target = $region13
    $region12: #{tpu_custom_call.1} parent=1 // pred_region
      %36 = dma.done [#allocation3], 512
    $region13: #{tpu_custom_call.1} parent=1 // pred_fallthru
      _
    // Predicated region
    $region14: #{tpu_custom_call.1} parent=1 // pred_check
      _
    $region15: #{tpu_custom_call.1} parent=1 // pred_check_branch
      %38 = sbr.rel (0) target = $region17
    $region16: #{tpu_custom_call.1} parent=1 // pred_region
      %39 = dma.done [#allocation6], 8192
    $region17: #{tpu_custom_call.1} parent=1 // pred_fallthru
      _
    %v40 = vld [vmem:[#allocation2] sm:$0xf]
    %v41 = vld [vmem:[#allocation2 + $0x4] sm:$0xf]
    %v42 = vld [vmem:[#allocation2 + $0x8] sm:$0xf]
    %v43 = vld [vmem:[#allocation2 + $0xc] sm:$0xf]
    %v44 = vld [vmem:[#allocation2 + $0x10] sm:$0xf]
    %v45 = vld [vmem:[#allocation2 + $0x14] sm:$0xf]
    %v46 = vld [vmem:[#allocation2 + $0x18] sm:$0xf]
    %v47 = vld [vmem:[#allocation2 + $0x1c] sm:$0xf]
    %v48 = vld [vmem:[#allocation5] sm:$0xff]
    %v49 = vld [vmem:[#allocation5 + $0x8] sm:$0xff]
    %v50 = vld [vmem:[#allocation5 + $0x10] sm:$0xff]
    %v51 = vld [vmem:[#allocation5 + $0x18] sm:$0xff]
    %v52 = vld [vmem:[#allocation5 + $0x20] sm:$0xff]
    %v53 = vld [vmem:[#allocation5 + $0x28] sm:$0xff]
    %v54 = vld [vmem:[#allocation5 + $0x30] sm:$0xff]
    %v55 = vld [vmem:[#allocation5 + $0x38] sm:$0xff]
    %v56 = vld [vmem:[#allocation5 + $0x40] sm:$0xff]
    %v57 = vld [vmem:[#allocation5 + $0x48] sm:$0xff]
    %v58 = vld [vmem:[#allocation5 + $0x50] sm:$0xff]
    %v59 = vld [vmem:[#allocation5 + $0x58] sm:$0xff]
    %v60 = vld [vmem:[#allocation5 + $0x60] sm:$0xff]
    %v61 = vld [vmem:[#allocation5 + $0x68] sm:$0xff]
    %v62 = vld [vmem:[#allocation5 + $0x70] sm:$0xff]
    %v63 = vld [vmem:[#allocation5 + $0x78] sm:$0xff]
    %v64 = vld [vmem:[#allocation5 + $0x80] sm:$0xff]
    %v65 = vld [vmem:[#allocation5 + $0x88] sm:$0xff]
    %v66 = vld [vmem:[#allocation5 + $0x90] sm:$0xff]
    %v67 = vld [vmem:[#allocation5 + $0x98] sm:$0xff]
    %v68 = vld [vmem:[#allocation5 + $0xa0] sm:$0xff]
    %v69 = vld [vmem:[#allocation5 + $0xa8] sm:$0xff]
    %v70 = vld [vmem:[#allocation5 + $0xb0] sm:$0xff]
    %v71 = vld [vmem:[#allocation5 + $0xb8] sm:$0xff]
    %v72 = vld [vmem:[#allocation5 + $0xc0] sm:$0xff]
    %v73 = vld [vmem:[#allocation5 + $0xc8] sm:$0xff]
    %v74 = vld [vmem:[#allocation5 + $0xd0] sm:$0xff]
    %v75 = vld [vmem:[#allocation5 + $0xd8] sm:$0xff]
    %v76 = vld [vmem:[#allocation5 + $0xe0] sm:$0xff]
    %v77 = vld [vmem:[#allocation5 + $0xe8] sm:$0xff]
    %v78 = vld [vmem:[#allocation5 + $0xf0] sm:$0xff]
    %v79 = vld [vmem:[#allocation5 + $0xf8] sm:$0xff]
    %v80 = vld [vmem:[#allocation5 + $0x100] sm:$0xff]
    %v81 = vld [vmem:[#allocation5 + $0x108] sm:$0xff]
    %v82 = vld [vmem:[#allocation5 + $0x110] sm:$0xff]
    %v83 = vld [vmem:[#allocation5 + $0x118] sm:$0xff]
    %v84 = vld [vmem:[#allocation5 + $0x120] sm:$0xff]
    %v85 = vld [vmem:[#allocation5 + $0x128] sm:$0xff]
    %v86 = vld [vmem:[#allocation5 + $0x130] sm:$0xff]
    %v87 = vld [vmem:[#allocation5 + $0x138] sm:$0xff]
    %v88 = vld [vmem:[#allocation5 + $0x140] sm:$0xff]
    %v89 = vld [vmem:[#allocation5 + $0x148] sm:$0xff]
    %v90 = vld [vmem:[#allocation5 + $0x150] sm:$0xff]
    %v91 = vld [vmem:[#allocation5 + $0x158] sm:$0xff]
    %v92 = vld [vmem:[#allocation5 + $0x160] sm:$0xff]
    %v93 = vld [vmem:[#allocation5 + $0x168] sm:$0xff]
    %v94 = vld [vmem:[#allocation5 + $0x170] sm:$0xff]
    %v95 = vld [vmem:[#allocation5 + $0x178] sm:$0xff]
    %v96 = vld [vmem:[#allocation5 + $0x180] sm:$0xff]
    %v97 = vld [vmem:[#allocation5 + $0x188] sm:$0xff]
    %v98 = vld [vmem:[#allocation5 + $0x190] sm:$0xff]
    %v99 = vld [vmem:[#allocation5 + $0x198] sm:$0xff]
    %v100 = vld [vmem:[#allocation5 + $0x1a0] sm:$0xff]
    %v101 = vld [vmem:[#allocation5 + $0x1a8] sm:$0xff]
    %v102 = vld [vmem:[#allocation5 + $0x1b0] sm:$0xff]
    %v103 = vld [vmem:[#allocation5 + $0x1b8] sm:$0xff]
    %v104 = vld [vmem:[#allocation5 + $0x1c0] sm:$0xff]
    %v105 = vld [vmem:[#allocation5 + $0x1c8] sm:$0xff]
    %v106 = vld [vmem:[#allocation5 + $0x1d0] sm:$0xff]
    %v107 = vld [vmem:[#allocation5 + $0x1d8] sm:$0xff]
    %v108 = vld [vmem:[#allocation5 + $0x1e0] sm:$0xff]
    %v109 = vld [vmem:[#allocation5 + $0x1e8] sm:$0xff]
    %v110 = vld [vmem:[#allocation5 + $0x1f0] sm:$0xff]
    %v111 = vld [vmem:[#allocation5 + $0x1f8] sm:$0xff]
    %v120 = vcombine.low %v40, %v41
    %v121 = vcombine.low %v42, %v43
    %v123 = vunpack.c.l.s4 1983009808
    %v124 = vunpack.c.0.s8 %v123
    %v125 = vlaneseq
    %v126 = vshrl.u32 %v125, 7
    %v127 = vsub.s32 %v124, %v126
    %v128 = vrot.slane %v120, %v127
    %v130 = vunpack.c.l.s4 1983009808
    %v131 = vunpack.c.0.s8 %v130
    %v132 = vlaneseq
    %v133 = vshrl.u32 %v132, 7
    %v134 = vsub.s32 %v131, %v133
    %v135 = vrot.slane %v121, %v134
    %v136 = vcombine.low %v128, %v135
    %v137 = vcombine.high %v128, %v135
    %v138 = vcombine.low %v44, %v45
    %v139 = vcombine.low %v46, %v47
    %v141 = vunpack.c.l.s4 1983009808
    %v142 = vunpack.c.0.s8 %v141
    %v143 = vlaneseq
    %v144 = vshrl.u32 %v143, 7
    %v145 = vsub.s32 %v142, %v144
    %v146 = vrot.slane %v138, %v145
    %v148 = vunpack.c.l.s4 1983009808
    %v149 = vunpack.c.0.s8 %v148
    %v150 = vlaneseq
    %v151 = vshrl.u32 %v150, 7
    %v152 = vsub.s32 %v149, %v151
    %v153 = vrot.slane %v139, %v152
    %v154 = vcombine.low %v146, %v153
    %v155 = vcombine.high %v146, %v153
    %160 = vmatprep.subr.mxu0 %v79
    %161 = vmatpush1.msra.mxu0 %v78
    %162 = vmatprep.subr.mxu0 %v77
    %163 = vmatpush1.msra.mxu0 %v76
    %164 = vmatprep.subr.mxu0 %v75
    %165 = vmatpush1.msra.mxu0 %v74
    %166 = vmatprep.subr.mxu0 %v73
    %167 = vmatpush1.msra.mxu0 %v72
    %168 = vmatprep.subr.mxu0 %v71
    %169 = vmatpush1.msra.mxu0 %v70
    %170 = vmatprep.subr.mxu0 %v69
    %171 = vmatpush1.msra.mxu0 %v68
    %172 = vmatprep.subr.mxu0 %v67
    %173 = vmatpush1.msra.mxu0 %v66
    %174 = vmatprep.subr.mxu0 %v65
    %175 = vmatpush1.msra.mxu0 %v64
    %176 = vmatprep.subr.mxu0 %v63
    %177 = vmatpush1.msra.mxu0 %v62
    %178 = vmatprep.subr.mxu0 %v61
    %179 = vmatpush1.msra.mxu0 %v60
    %180 = vmatprep.subr.mxu0 %v59
    %181 = vmatpush1.msra.mxu0 %v58
    %182 = vmatprep.subr.mxu0 %v57
    %183 = vmatpush1.msra.mxu0 %v56
    %184 = vmatprep.subr.mxu0 %v55
    %185 = vmatpush1.msra.mxu0 %v54
    %186 = vmatprep.subr.mxu0 %v53
    %187 = vmatpush1.msra.mxu0 %v52
    %188 = vmatprep.subr.mxu0 %v51
    %189 = vmatpush1.msra.mxu0 %v50
    %190 = vmatprep.subr.mxu0 %v49
    %191 = vmatpush1.msra.mxu0 %v48
    %192 = vmatprep.subr.mxu0 %v111
    %193 = vmatpush2.msra.mxu0 %v110
    %194 = vmatprep.subr.mxu0 %v109
    %195 = vmatpush2.msra.mxu0 %v108
    %196 = vmatprep.subr.mxu0 %v107
    %197 = vmatpush2.msra.mxu0 %v106
    %198 = vmatprep.subr.mxu0 %v105
    %199 = vmatpush2.msra.mxu0 %v104
    %200 = vmatprep.subr.mxu0 %v103
    %201 = vmatpush2.msra.mxu0 %v102
    %202 = vmatprep.subr.mxu0 %v101
    %203 = vmatpush2.msra.mxu0 %v100
    %204 = vmatprep.subr.mxu0 %v99
    %205 = vmatpush2.msra.mxu0 %v98
    %206 = vmatprep.subr.mxu0 %v97
    %207 = vmatpush2.msra.mxu0 %v96
    %208 = vmatprep.subr.mxu0 %v95
    %209 = vmatpush2.msra.mxu0 %v94
    %210 = vmatprep.subr.mxu0 %v93
    %211 = vmatpush2.msra.mxu0 %v92
    %212 = vmatprep.subr.mxu0 %v91
    %213 = vmatpush2.msra.mxu0 %v90
    %214 = vmatprep.subr.mxu0 %v89
    %215 = vmatpush2.msra.mxu0 %v88
    %216 = vmatprep.subr.mxu0 %v87
    %217 = vmatpush2.msra.mxu0 %v86
    %218 = vmatprep.subr.mxu0 %v85
    %219 = vmatpush2.msra.mxu0 %v84
    %220 = vmatprep.subr.mxu0 %v83
    %221 = vmatpush2.msra.mxu0 %v82
    %222 = vmatprep.subr.mxu0 %v81
    %223 = vmatpush2.msra.mxu0 %v80
    %224 = vmatprep.mubr.f32.mxu0 %v137
    %225 = vmatmul.mubr.f32.gmra.mxu0 %v136
    %v226 = vpop.f32.mrf.mxu0
    %v227 = vadd.f32 0.0, %v226
    %v228 = vpop.f32.mrf.mxu0
    %v229 = vadd.f32 0.0, %v228
    %230 = vmatprep.mubr.f32.mxu0 %v155
    %231 = vmatmul.mubr.f32.gmra.mxu0 %v154
    %v232 = vpop.f32.mrf.mxu0
    %v233 = vadd.f32 0.0, %v232
    %v234 = vpop.f32.mrf.mxu0
    %v235 = vadd.f32 0.0, %v234
    %236 = vdwg.mxu0
    %v239 = vcombine.high %v227, %v227
    %v241 = vunpack.c.l.s4 1983009808
    %v242 = vunpack.c.0.s8 %v241
    %v243 = vlaneseq
    %v244 = vshrl.u32 %v243, 7
    %v245 = vsub.s32 %v242, %v244
    %v246 = vrot.slane %v227, %v245
    %v248 = vunpack.c.l.s4 1983009808
    %v249 = vunpack.c.0.s8 %v248
    %v250 = vlaneseq
    %v251 = vshrl.u32 %v250, 7
    %v252 = vsub.s32 %v249, %v251
    %v253 = vrot.slane %v239, %v252
    %v254 = vcombine.high %v246, %v246
    %v255 = vcombine.high %v253, %v253
    %v256 = vcombine.high %v233, %v233
    %v258 = vunpack.c.l.s4 1983009808
    %v259 = vunpack.c.0.s8 %v258
    %v260 = vlaneseq
    %v261 = vshrl.u32 %v260, 7
    %v262 = vsub.s32 %v259, %v261
    %v263 = vrot.slane %v233, %v262
    %v265 = vunpack.c.l.s4 1983009808
    %v266 = vunpack.c.0.s8 %v265
    %v267 = vlaneseq
    %v268 = vshrl.u32 %v267, 7
    %v269 = vsub.s32 %v266, %v268
    %v270 = vrot.slane %v256, %v269
    %v271 = vcombine.high %v263, %v263
    %v272 = vcombine.high %v270, %v270
    %v281 = vmul.f32 %v40, %v246
    %v282 = vmul.f32 %v41, %v254
    %v283 = vmul.f32 %v42, %v253
    %v284 = vmul.f32 %v43, %v255
    %v285 = vmul.f32 %v44, %v263
    %v286 = vmul.f32 %v45, %v271
    %v287 = vmul.f32 %v46, %v270
    %v288 = vmul.f32 %v47, %v272
    %297 = vrot.lane.b32.xlu0 %v281, 96
    %v298 = vpop.permute.xlu0 %297
    %299 = vrot.lane.b32.xlu0 %v282, 96
    %v300 = vpop.permute.xlu0 %299
    %301 = vrot.lane.b32.xlu0 %v283, 96
    %v302 = vpop.permute.xlu0 %301
    %303 = vrot.lane.b32.xlu0 %v284, 96
    %v304 = vpop.permute.xlu0 %303
    %305 = vrot.lane.b32.xlu0 %v285, 96
    %v306 = vpop.permute.xlu0 %305
    %307 = vrot.lane.b32.xlu0 %v286, 96
    %v308 = vpop.permute.xlu0 %307
    %309 = vrot.lane.b32.xlu0 %v287, 96
    %v310 = vpop.permute.xlu0 %309
    %311 = vrot.lane.b32.xlu0 %v288, 96
    %v312 = vpop.permute.xlu0 %311
    %v321 = vadd.f32 %v281, %v298
    %v322 = vadd.f32 %v282, %v300
    %v323 = vadd.f32 %v283, %v302
    %v324 = vadd.f32 %v284, %v304
    %v325 = vadd.f32 %v285, %v306
    %v326 = vadd.f32 %v286, %v308
    %v327 = vadd.f32 %v287, %v310
    %v328 = vadd.f32 %v288, %v312
    %329 = vrot.lane.b32.xlu0 %v281, 64
    %v330 = vpop.permute.xlu0 %329
    %331 = vrot.lane.b32.xlu0 %v282, 64
    %v332 = vpop.permute.xlu0 %331
    %333 = vrot.lane.b32.xlu0 %v283, 64
    %v334 = vpop.permute.xlu0 %333
    %335 = vrot.lane.b32.xlu0 %v284, 64
    %v336 = vpop.permute.xlu0 %335
    %337 = vrot.lane.b32.xlu0 %v285, 64
    %v338 = vpop.permute.xlu0 %337
    %339 = vrot.lane.b32.xlu0 %v286, 64
    %v340 = vpop.permute.xlu0 %339
    %341 = vrot.lane.b32.xlu0 %v287, 64
    %v342 = vpop.permute.xlu0 %341
    %343 = vrot.lane.b32.xlu0 %v288, 64
    %v344 = vpop.permute.xlu0 %343
    %v353 = vadd.f32 %v321, %v330
    %v354 = vadd.f32 %v322, %v332
    %v355 = vadd.f32 %v323, %v334
    %v356 = vadd.f32 %v324, %v336
    %v357 = vadd.f32 %v325, %v338
    %v358 = vadd.f32 %v326, %v340
    %v359 = vadd.f32 %v327, %v342
    %v360 = vadd.f32 %v328, %v344
    %361 = vrot.lane.b32.xlu0 %v281, 32
    %v362 = vpop.permute.xlu0 %361
    %363 = vrot.lane.b32.xlu0 %v282, 32
    %v364 = vpop.permute.xlu0 %363
    %365 = vrot.lane.b32.xlu0 %v283, 32
    %v366 = vpop.permute.xlu0 %365
    %367 = vrot.lane.b32.xlu0 %v284, 32
    %v368 = vpop.permute.xlu0 %367
    %369 = vrot.lane.b32.xlu0 %v285, 32
    %v370 = vpop.permute.xlu0 %369
    %371 = vrot.lane.b32.xlu0 %v286, 32
    %v372 = vpop.permute.xlu0 %371
    %373 = vrot.lane.b32.xlu0 %v287, 32
    %v374 = vpop.permute.xlu0 %373
    %375 = vrot.lane.b32.xlu0 %v288, 32
    %v376 = vpop.permute.xlu0 %375
    %v385 = vadd.f32 %v353, %v362
    %v386 = vadd.f32 %v354, %v364
    %v387 = vadd.f32 %v355, %v366
    %v388 = vadd.f32 %v356, %v368
    %v389 = vadd.f32 %v357, %v370
    %v390 = vadd.f32 %v358, %v372
    %v391 = vadd.f32 %v359, %v374
    %v392 = vadd.f32 %v360, %v376
    %v393 = vrot.slane %v40, 2
    %v394 = vrot.slane %v41, 2
    %v395 = vrot.slane %v42, 2
    %v396 = vrot.slane %v43, 2
    %v397 = vrot.slane %v44, 2
    %v398 = vrot.slane %v45, 2
    %v399 = vrot.slane %v46, 2
    %v400 = vrot.slane %v47, 2
    %v411 = vcombine.high %v229, %v229
    %v413 = vunpack.c.l.s4 1983009808
    %v414 = vunpack.c.0.s8 %v413
    %v415 = vlaneseq
    %v416 = vshrl.u32 %v415, 7
    %v417 = vsub.s32 %v414, %v416
    %v418 = vrot.slane %v229, %v417
    %v420 = vunpack.c.l.s4 1983009808
    %v421 = vunpack.c.0.s8 %v420
    %v422 = vlaneseq
    %v423 = vshrl.u32 %v422, 7
    %v424 = vsub.s32 %v421, %v423
    %v425 = vrot.slane %v411, %v424
    %v426 = vcombine.high %v418, %v418
    %v427 = vcombine.high %v425, %v425
    %v428 = vcombine.high %v235, %v235
    %v430 = vunpack.c.l.s4 1983009808
    %v431 = vunpack.c.0.s8 %v430
    %v432 = vlaneseq
    %v433 = vshrl.u32 %v432, 7
    %v434 = vsub.s32 %v431, %v433
    %v435 = vrot.slane %v235, %v434
    %v437 = vunpack.c.l.s4 1983009808
    %v438 = vunpack.c.0.s8 %v437
    %v439 = vlaneseq
    %v440 = vshrl.u32 %v439, 7
    %v441 = vsub.s32 %v438, %v440
    %v442 = vrot.slane %v428, %v441
    %v443 = vcombine.high %v435, %v435
    %v444 = vcombine.high %v442, %v442
    %v453 = vmul.f32 %v393, %v418
    %v454 = vmul.f32 %v394, %v426
    %v455 = vmul.f32 %v395, %v425
    %v456 = vmul.f32 %v396, %v427
    %v457 = vmul.f32 %v397, %v435
    %v458 = vmul.f32 %v398, %v443
    %v459 = vmul.f32 %v399, %v442
    %v460 = vmul.f32 %v400, %v444
    %v461 = vadd.f32 %v385, %v453
    %v462 = vadd.f32 %v386, %v454
    %v463 = vadd.f32 %v387, %v455
    %v464 = vadd.f32 %v388, %v456
    %v465 = vadd.f32 %v389, %v457
    %v466 = vadd.f32 %v390, %v458
    %v467 = vadd.f32 %v391, %v459
    %v468 = vadd.f32 %v392, %v460
    %469 = vrot.lane.b32.xlu0 %v40, 96
    %v470 = vpop.permute.xlu0 %469
    %471 = vrot.lane.b32.xlu0 %v41, 96
    %v472 = vpop.permute.xlu0 %471
    %473 = vrot.lane.b32.xlu0 %v42, 96
    %v474 = vpop.permute.xlu0 %473
    %475 = vrot.lane.b32.xlu0 %v43, 96
    %v476 = vpop.permute.xlu0 %475
    %477 = vrot.lane.b32.xlu0 %v44, 96
    %v478 = vpop.permute.xlu0 %477
    %479 = vrot.lane.b32.xlu0 %v45, 96
    %v480 = vpop.permute.xlu0 %479
    %481 = vrot.lane.b32.xlu0 %v46, 96
    %v482 = vpop.permute.xlu0 %481
    %483 = vrot.lane.b32.xlu0 %v47, 96
    %v484 = vpop.permute.xlu0 %483
    %v485 = vrot.slane %v470, 2
    %v486 = vrot.slane %v472, 2
    %v487 = vrot.slane %v474, 2
    %v488 = vrot.slane %v476, 2
    %v489 = vrot.slane %v478, 2
    %v490 = vrot.slane %v480, 2
    %v491 = vrot.slane %v482, 2
    %v492 = vrot.slane %v484, 2
    %501 = vrot.lane.b32.xlu0 %v418, 96
    %v502 = vpop.permute.xlu0 %501
    %503 = vrot.lane.b32.xlu0 %v426, 96
    %v504 = vpop.permute.xlu0 %503
    %505 = vrot.lane.b32.xlu0 %v425, 96
    %v506 = vpop.permute.xlu0 %505
    %507 = vrot.lane.b32.xlu0 %v427, 96
    %v508 = vpop.permute.xlu0 %507
    %509 = vrot.lane.b32.xlu0 %v435, 96
    %v510 = vpop.permute.xlu0 %509
    %511 = vrot.lane.b32.xlu0 %v443, 96
    %v512 = vpop.permute.xlu0 %511
    %513 = vrot.lane.b32.xlu0 %v442, 96
    %v514 = vpop.permute.xlu0 %513
    %515 = vrot.lane.b32.xlu0 %v444, 96
    %v516 = vpop.permute.xlu0 %515
    %v525 = vmul.f32 %v485, %v502
    %v526 = vmul.f32 %v486, %v504
    %v527 = vmul.f32 %v487, %v506
    %v528 = vmul.f32 %v488, %v508
    %v529 = vmul.f32 %v489, %v510
    %v530 = vmul.f32 %v490, %v512
    %v531 = vmul.f32 %v491, %v514
    %v532 = vmul.f32 %v492, %v516
    %v533 = vadd.f32 %v461, %v525
    %v534 = vadd.f32 %v462, %v526
    %v535 = vadd.f32 %v463, %v527
    %v536 = vadd.f32 %v464, %v528
    %v537 = vadd.f32 %v465, %v529
    %v538 = vadd.f32 %v466, %v530
    %v539 = vadd.f32 %v467, %v531
    %v540 = vadd.f32 %v468, %v532
    %541 = vrot.lane.b32.xlu0 %v40, 64
    %v542 = vpop.permute.xlu0 %541
    %543 = vrot.lane.b32.xlu0 %v41, 64
    %v544 = vpop.permute.xlu0 %543
    %545 = vrot.lane.b32.xlu0 %v42, 64
    %v546 = vpop.permute.xlu0 %545
    %547 = vrot.lane.b32.xlu0 %v43, 64
    %v548 = vpop.permute.xlu0 %547
    %549 = vrot.lane.b32.xlu0 %v44, 64
    %v550 = vpop.permute.xlu0 %549
    %551 = vrot.lane.b32.xlu0 %v45, 64
    %v552 = vpop.permute.xlu0 %551
    %553 = vrot.lane.b32.xlu0 %v46, 64
    %v554 = vpop.permute.xlu0 %553
    %555 = vrot.lane.b32.xlu0 %v47, 64
    %v556 = vpop.permute.xlu0 %555
    %v557 = vrot.slane %v542, 2
    %v558 = vrot.slane %v544, 2
    %v559 = vrot.slane %v546, 2
    %v560 = vrot.slane %v548, 2
    %v561 = vrot.slane %v550, 2
    %v562 = vrot.slane %v552, 2
    %v563 = vrot.slane %v554, 2
    %v564 = vrot.slane %v556, 2
    %573 = vrot.lane.b32.xlu0 %v418, 64
    %v574 = vpop.permute.xlu0 %573
    %575 = vrot.lane.b32.xlu0 %v426, 64
    %v576 = vpop.permute.xlu0 %575
    %577 = vrot.lane.b32.xlu0 %v425, 64
    %v578 = vpop.permute.xlu0 %577
    %579 = vrot.lane.b32.xlu0 %v427, 64
    %v580 = vpop.permute.xlu0 %579
    %581 = vrot.lane.b32.xlu0 %v435, 64
    %v582 = vpop.permute.xlu0 %581
    %583 = vrot.lane.b32.xlu0 %v443, 64
    %v584 = vpop.permute.xlu0 %583
    %585 = vrot.lane.b32.xlu0 %v442, 64
    %v586 = vpop.permute.xlu0 %585
    %587 = vrot.lane.b32.xlu0 %v444, 64
    %v588 = vpop.permute.xlu0 %587
    %v597 = vmul.f32 %v557, %v574
    %v598 = vmul.f32 %v558, %v576
    %v599 = vmul.f32 %v559, %v578
    %v600 = vmul.f32 %v560, %v580
    %v601 = vmul.f32 %v561, %v582
    %v602 = vmul.f32 %v562, %v584
    %v603 = vmul.f32 %v563, %v586
    %v604 = vmul.f32 %v564, %v588
    %v605 = vadd.f32 %v533, %v597
    %v606 = vadd.f32 %v534, %v598
    %v607 = vadd.f32 %v535, %v599
    %v608 = vadd.f32 %v536, %v600
    %v609 = vadd.f32 %v537, %v601
    %v610 = vadd.f32 %v538, %v602
    %v611 = vadd.f32 %v539, %v603
    %v612 = vadd.f32 %v540, %v604
    %613 = vrot.lane.b32.xlu0 %v40, 32
    %v614 = vpop.permute.xlu0 %613
    %615 = vrot.lane.b32.xlu0 %v41, 32
    %v616 = vpop.permute.xlu0 %615
    %617 = vrot.lane.b32.xlu0 %v42, 32
    %v618 = vpop.permute.xlu0 %617
    %619 = vrot.lane.b32.xlu0 %v43, 32
    %v620 = vpop.permute.xlu0 %619
    %621 = vrot.lane.b32.xlu0 %v44, 32
    %v622 = vpop.permute.xlu0 %621
    %623 = vrot.lane.b32.xlu0 %v45, 32
    %v624 = vpop.permute.xlu0 %623
    %625 = vrot.lane.b32.xlu0 %v46, 32
    %v626 = vpop.permute.xlu0 %625
    %627 = vrot.lane.b32.xlu0 %v47, 32
    %v628 = vpop.permute.xlu0 %627
    %v629 = vrot.slane %v614, 2
    %v630 = vrot.slane %v616, 2
    %v631 = vrot.slane %v618, 2
    %v632 = vrot.slane %v620, 2
    %v633 = vrot.slane %v622, 2
    %v634 = vrot.slane %v624, 2
    %v635 = vrot.slane %v626, 2
    %v636 = vrot.slane %v628, 2
    %645 = vrot.lane.b32.xlu0 %v418, 32
    %v646 = vpop.permute.xlu0 %645
    %647 = vrot.lane.b32.xlu0 %v426, 32
    %v648 = vpop.permute.xlu0 %647
    %649 = vrot.lane.b32.xlu0 %v425, 32
    %v650 = vpop.permute.xlu0 %649
    %651 = vrot.lane.b32.xlu0 %v427, 32
    %v652 = vpop.permute.xlu0 %651
    %653 = vrot.lane.b32.xlu0 %v435, 32
    %v654 = vpop.permute.xlu0 %653
    %655 = vrot.lane.b32.xlu0 %v443, 32
    %v656 = vpop.permute.xlu0 %655
    %657 = vrot.lane.b32.xlu0 %v442, 32
    %v658 = vpop.permute.xlu0 %657
    %659 = vrot.lane.b32.xlu0 %v444, 32
    %v660 = vpop.permute.xlu0 %659
    %v669 = vmul.f32 %v629, %v646
    %v670 = vmul.f32 %v630, %v648
    %v671 = vmul.f32 %v631, %v650
    %v672 = vmul.f32 %v632, %v652
    %v673 = vmul.f32 %v633, %v654
    %v674 = vmul.f32 %v634, %v656
    %v675 = vmul.f32 %v635, %v658
    %v676 = vmul.f32 %v636, %v660
    %v677 = vadd.f32 %v605, %v669
    %v678 = vadd.f32 %v606, %v670
    %v679 = vadd.f32 %v607, %v671
    %v680 = vadd.f32 %v608, %v672
    %v681 = vadd.f32 %v609, %v673
    %v682 = vadd.f32 %v610, %v674
    %v683 = vadd.f32 %v611, %v675
    %v684 = vadd.f32 %v612, %v676
    %v693 = vcombine.low %v677, %v678
    %v694 = vcombine.low %v679, %v680
    %v696 = vunpack.c.l.s4 1983009808
    %v697 = vunpack.c.0.s8 %v696
    %v698 = vlaneseq
    %v699 = vshrl.u32 %v698, 7
    %v700 = vsub.s32 %v697, %v699
    %v701 = vrot.slane %v693, %v700
    %v703 = vunpack.c.l.s4 1983009808
    %v704 = vunpack.c.0.s8 %v703
    %v705 = vlaneseq
    %v706 = vshrl.u32 %v705, 7
    %v707 = vsub.s32 %v704, %v706
    %v708 = vrot.slane %v694, %v707
    %v709 = vcombine.low %v701, %v708
    %v710 = vcombine.low %v681, %v682
    %v711 = vcombine.low %v683, %v684
    %v713 = vunpack.c.l.s4 1983009808
    %v714 = vunpack.c.0.s8 %v713
    %v715 = vlaneseq
    %v716 = vshrl.u32 %v715, 7
    %v717 = vsub.s32 %v714, %v716
    %v718 = vrot.slane %v710, %v717
    %v720 = vunpack.c.l.s4 1983009808
    %v721 = vunpack.c.0.s8 %v720
    %v722 = vlaneseq
    %v723 = vshrl.u32 %v722, 7
    %v724 = vsub.s32 %v721, %v723
    %v725 = vrot.slane %v711, %v724
    %v726 = vcombine.low %v718, %v725
    %vm729 = vcmask 261120
    %730 = vst.msk [vmem:[#allocation7] sm:$0xff] %vm729, %v709
    %731 = vst.msk [vmem:[#allocation7 + $0x8] sm:$0xff] %vm729, %v726
    // Predicated region
    $region18: #{tpu_custom_call.1} parent=1 // pred_check
      _
    $region19: #{tpu_custom_call.1} parent=1 // pred_check_branch
      %733 = sbr.rel (0) target = $region21
    $region20: #{tpu_custom_call.1} parent=1 // pred_region
      %s735 = ssub.s32 256, 32
      %736 = vsyncadd [#allocation4], %s735
      %s737 = sshll.u32 [#allocation7], 4
      %s738 = int_to_ptr.vmem [resolvable:$true] %s737
      %743 = dma.vmem_to_hbm [thread:$0]  %s738, 32, %s2, [#allocation4], 32, 32, 2
    $region21: #{tpu_custom_call.1} parent=1 // pred_fallthru
      _
    // Predicated region
    $region22: #{tpu_custom_call.1} parent=1 // pred_check
      _
    $region23: #{tpu_custom_call.1} parent=1 // pred_check_branch
      %745 = sbr.rel (0) target = $region25
    $region24: #{tpu_custom_call.1} parent=1 // pred_region
      %746 = dma.done [#allocation4], 256
    $region25: #{tpu_custom_call.1} parent=1 // pred_fallthru
      _
    %747 = vsyncpa [#allocation3], 1
    %748 = vsyncpa [#allocation6], 1
    %749 = vsyncpa [#allocation4], 1

</llo_original>
